<compile_context>
chip_gen: v6e
topology: v6e:2x2x1
jax: 0.10.0
libtpu: 0.0.40
codegen_flags: <defaults>
</compile_context>

<pallas_src>
import functools

import jax
import jax.numpy as jnp
from jax import lax
from jax.experimental import pallas as pl
from jax.experimental.pallas import tpu as pltpu


def _time_mixing_kernel(x_ref, m_ref, bias_ref, gamma_ref, beta_ref, o_ref, *, eps):
    x = x_ref[...].astype(jnp.float32)                     # (TB, S*C), native-dtype DMA, f32 compute

    # --- LayerNorm over (S, C) == over the flattened row.  Two-pass variance. ---
    mean = jnp.mean(x, axis=1, keepdims=True)              # (TB, 1)  lane reduce
    xc = x - mean
    var = jnp.mean(xc * xc, axis=1, keepdims=True)         # (TB, 1)
    inv = lax.rsqrt(var + eps)                             # EUP rsqrt (free slot)
    y = xc * inv * gamma_ref[...] + beta_ref[...]          # (TB, S*C); (1,S*C) params broadcast

    # --- time mixing: Linear(S,S) along time == y_flat @ kron(W^T, I_C), one MXU matmul ---
    z = jnp.dot(y.astype(jnp.bfloat16), m_ref[...],
                preferred_element_type=jnp.float32)        # (TB, S*C), f32 accumulation
    z = jnp.maximum(z + bias_ref[...], 0.0)                # bias + ReLU

    # --- dropout: MonteCarloDropout with p=0.0 -> identity (deterministic) ---
    # TODO(synk): for p>0 draw a keep-mask with pltpu.prng_seed/prng_random_bits and
    # scale by 1/(1-p) to reproduce MC dropout.

    # --- residual, stored lane-dense in the native output dtype ---
    o_ref[...] = (x + z).astype(o_ref.dtype)


def _cdiv(a, b):
    return -(-a // b)


def _round_up(a, b):
    return _cdiv(a, b) * b


def _pick_batch_tile(sc, x_itemsize, out_itemsize):
    """VMEM-budgeted max batch tile (multiple of 8) + buffer-math for the vmem limit."""
    try:
        vmem_cap = pltpu.get_tpu_info().vmem_capacity_bytes
    except Exception:
        vmem_cap = 64 * 1024 * 1024                        # v7x floor if the query is unavailable
    budget = vmem_cap // 2                                 # headroom for compiler scratch / spills
    lanes = _round_up(sc, 128)
    # constants (double-buffered): bf16 mixing matrix + three small f32 param rows
    const_bytes = 2 * (_round_up(sc, 16) * lanes * 2 + 3 * 8 * lanes * 4)
    # per batch row: double-buffered in/out blocks + ~3 f32 temporaries (x, y, z)
    per_row = lanes * (2 * x_itemsize + 2 * out_itemsize + 3 * 4)
    avail = max(budget - const_bytes, 8 * per_row)
    tb_max = max(8, (avail // per_row) // 8 * 8)
    return tb_max, vmem_cap, const_bytes, per_row


def time_mixing(x, w, b, gamma, beta, *, eps=1e-5):
    """Forward of _TimeMixing.  x: (B, S, C); w: (S, S); b: (S,); gamma/beta: (S, C)."""
    B, S, C = x.shape
    SC = S * C
    dtype = x.dtype
    itemsize = jnp.dtype(dtype).itemsize

    # Flat row-major view (B, S, C) -> (B, S*C): metadata only, no HBM pass.
    x_flat = x.reshape(B, SC)

    tb_max, vmem_cap, const_bytes, per_row = _pick_batch_tile(SC, itemsize, itemsize)

    b_pad0 = _round_up(B, 8)
    tb = min(tb_max, b_pad0)
    if b_pad0 >= 16:
        # Keep >= 2 batch chunks so the "parallel" axis can shard across v7x's two
        # TensorCores (harmless extra grid step on single-TC v5e/v6e).
        tb = min(tb, _round_up(_cdiv(b_pad0, 2), 8))
    nb = _cdiv(b_pad0, tb)
    b_pad = nb * tb
    if b_pad != B:
        # Tiny pad so the batch tile is a multiple of 8 sublanes; padded rows only
        # produce finite garbage that is sliced away below.
        x_flat = jnp.pad(x_flat, ((0, b_pad - B), (0, 0)))

    # Fold "permute + Linear(S,S) + permute" into one lane-mixing matrix:
    #   M[s*C + c, t*C + c'] = W[t, s] * delta(c, c')  ==  kron(W^T, I_C)
    m = jnp.kron(w.T.astype(jnp.float32),
                 jnp.eye(C, dtype=jnp.float32)).astype(jnp.bfloat16)    # (S*C, S*C)
    bias_flat = jnp.repeat(b.astype(jnp.float32), C).reshape(1, SC)     # bias[t*C + c] = b[t]
    gamma_flat = gamma.astype(jnp.float32).reshape(1, SC)
    beta_flat = beta.astype(jnp.float32).reshape(1, SC)

    vmem_limit = int(min(vmem_cap * 3 // 4,
                         max(2 * (const_bytes + tb * per_row), 32 * 1024 * 1024)))

    kernel = functools.partial(_time_mixing_kernel, eps=float(eps))

    out_flat = pl.pallas_call(
        kernel,
        out_shape=jax.ShapeDtypeStruct((b_pad, SC), dtype),
        grid_spec=pltpu.PrefetchScalarGridSpec(
            num_scalar_prefetch=0,
            grid=(nb,),
            in_specs=[
                pl.BlockSpec((tb, SC), lambda i: (i, 0)),   # x rows, native dtype, lane-dense
                pl.BlockSpec((SC, SC), lambda i: (0, 0)),   # kron(W^T, I_C), bf16, fetched once
                pl.BlockSpec((1, SC), lambda i: (0, 0)),    # fc1 bias (flattened over lanes)
                pl.BlockSpec((1, SC), lambda i: (0, 0)),    # LayerNorm gamma (flattened)
                pl.BlockSpec((1, SC), lambda i: (0, 0)),    # LayerNorm beta  (flattened)
            ],
            out_specs=pl.BlockSpec((tb, SC), lambda i: (i, 0)),
        ),
        compiler_params=pltpu.CompilerParams(
            dimension_semantics=("parallel",),              # batch chunks are independent
            vmem_limit_bytes=vmem_limit,
        ),
    )(x_flat, m, bias_flat, gamma_flat, beta_flat)

    out_flat = out_flat[:B] if b_pad != B else out_flat
    return out_flat.reshape(B, S, C)


def time_mixing_ref(x, w, b, gamma, beta, *, eps=1e-5):
    """Pure-JAX f32 reference mirroring the PyTorch forward exactly."""
    mean = jnp.mean(x, axis=(1, 2), keepdims=True)
    var = jnp.mean((x - mean) ** 2, axis=(1, 2), keepdims=True)
    y = (x - mean) / jnp.sqrt(var + eps) * gamma[None] + beta[None]
    y_t = jnp.transpose(y, (0, 2, 1))                       # (B, C, S)
    z = jnp.einsum("bcs,ts->bct", y_t, w) + b[None, None]   # Linear(S, S) along time
    z = jnp.maximum(z, 0.0)                                 # activation (ReLU)
    return x + jnp.transpose(z, (0, 2, 1))                  # residual


if __name__ == "__main__":
    # Small shapes consistent with the module: batch=2, sequence_length=8, input_dim=32
    B, S, C = 2, 8, 32
    key = jax.random.PRNGKey(0)
    kx, kw, kb, kg, kbt = jax.random.split(key, 5)

    x = jax.random.normal(kx, (B, S, C), dtype=jnp.float32)
    # Deterministic synthetic parameters (not a checkpoint load)
    w = jax.random.normal(kw, (S, S), dtype=jnp.float32) * (1.0 / jnp.sqrt(S))
    b = jax.random.normal(kb, (S,), dtype=jnp.float32) * 0.01
    gamma = jnp.ones((S, C), dtype=jnp.float32) + 0.1 * jax.random.normal(kg, (S, C), dtype=jnp.float32)
    beta = 0.1 * jax.random.normal(kbt, (S, C), dtype=jnp.float32)

    out = jax.block_until_ready(time_mixing(x, w, b, gamma, beta))
    ref = time_mixing_ref(x, w, b, gamma, beta)
    assert out.shape == ref.shape
    # bf16 MXU operands for the time-mix matmul -> loosened tolerance vs f32 reference
    assert jnp.allclose(out, ref, atol=2e-2, rtol=2e-2), "mismatch vs reference"
    print("KERNEL_OK")
</pallas_src>

<mosaic_0001>
module attributes {stable_mosaic.version = 11 : i64} {
  func.func @_time_mixing_kernel(%arg0: i32, %arg1: memref<8x256xf32, #tpu.memory_space<vmem>>, %arg2: memref<256x256xbf16, #tpu.memory_space<vmem>>, %arg3: memref<1x256xf32, #tpu.memory_space<vmem>>, %arg4: memref<1x256xf32, #tpu.memory_space<vmem>>, %arg5: memref<1x256xf32, #tpu.memory_space<vmem>>, %arg6: memref<8x256xf32, #tpu.memory_space<vmem>>) attributes {dimension_semantics = [#tpu.dimension_semantics<parallel>], iteration_bounds = array<i64: 1>, scalar_prefetch = 0 : i64, scratch_operands = 0 : i64, tpu.core_type = #tpu.core_type<tc>, window_params = [{transform_indices = @transform_0, window_bounds = array<i64: 8, 256>}, {pipeline_mode = #tpu.pipeline_mode<synchronous>, transform_indices = @transform_1, window_bounds = array<i64: 256, 256>}, {pipeline_mode = #tpu.pipeline_mode<synchronous>, transform_indices = @transform_2, window_bounds = array<i64: 1, 256>}, {pipeline_mode = #tpu.pipeline_mode<synchronous>, transform_indices = @transform_3, window_bounds = array<i64: 1, 256>}, {pipeline_mode = #tpu.pipeline_mode<synchronous>, transform_indices = @transform_4, window_bounds = array<i64: 1, 256>}, {transform_indices = @transform_5, window_bounds = array<i64: 8, 256>}]} {
    %c0 = arith.constant 0 : index
    %c0_0 = arith.constant 0 : index
    %0 = vector.load %arg1[%c0, %c0_0] : memref<8x256xf32, #tpu.memory_space<vmem>>, vector<8x256xf32>
    %cst = arith.constant dense<0.000000e+00> : vector<8xf32>
    %1 = vector.multi_reduction <add>, %0, %cst [1] : vector<8x256xf32> to vector<8xf32>
    %2 = vector.shape_cast %1 : vector<8xf32> to vector<8x1xf32>
    %cst_1 = arith.constant 2.560000e+02 : f32
    %3 = vector.broadcast %cst_1 : f32 to vector<8x1xf32>
    %4 = arith.divf %2, %3 : vector<8x1xf32>
    %5 = vector.broadcast %4 : vector<8x1xf32> to vector<8x256xf32>
    %6 = arith.subf %0, %5 : vector<8x256xf32>
    %7 = arith.mulf %6, %6 : vector<8x256xf32>
    %cst_2 = arith.constant dense<0.000000e+00> : vector<8xf32>
    %8 = vector.multi_reduction <add>, %7, %cst_2 [1] : vector<8x256xf32> to vector<8xf32>
    %9 = vector.shape_cast %8 : vector<8xf32> to vector<8x1xf32>
    %cst_3 = arith.constant 2.560000e+02 : f32
    %10 = vector.broadcast %cst_3 : f32 to vector<8x1xf32>
    %11 = arith.divf %9, %10 : vector<8x1xf32>
    %cst_4 = arith.constant 9.99999974E-6 : f32
    %12 = vector.broadcast %cst_4 : f32 to vector<8x1xf32>
    %13 = arith.addf %11, %12 : vector<8x1xf32>
    %14 = math.rsqrt %13 : vector<8x1xf32>
    %15 = vector.broadcast %14 : vector<8x1xf32> to vector<8x256xf32>
    %16 = arith.mulf %6, %15 : vector<8x256xf32>
    %c0_5 = arith.constant 0 : index
    %c0_6 = arith.constant 0 : index
    %17 = vector.load %arg4[%c0_5, %c0_6] : memref<1x256xf32, #tpu.memory_space<vmem>>, vector<1x256xf32>
    %18 = vector.broadcast %17 : vector<1x256xf32> to vector<8x256xf32>
    %19 = arith.mulf %16, %18 : vector<8x256xf32>
    %c0_7 = arith.constant 0 : index
    %c0_8 = arith.constant 0 : index
    %20 = vector.load %arg5[%c0_7, %c0_8] : memref<1x256xf32, #tpu.memory_space<vmem>>, vector<1x256xf32>
    %21 = vector.broadcast %20 : vector<1x256xf32> to vector<8x256xf32>
    %22 = arith.addf %19, %21 : vector<8x256xf32>
    %23 = arith.truncf %22 : vector<8x256xf32> to vector<8x256xbf16>
    %c0_9 = arith.constant 0 : index
    %c0_10 = arith.constant 0 : index
    %24 = vector.load %arg2[%c0_9, %c0_10] : memref<256x256xbf16, #tpu.memory_space<vmem>>, vector<256x256xbf16>
    %cst_11 = arith.constant dense<0.000000e+00> : vector<8x256xf32>
    %25 = tpu.matmul %23, %24, %cst_11 {dimension_numbers = #tpu.dot_dimension_numbers<[1], [0], [0], [1], [0, 0, 1, 1], [], []>} : vector<8x256xbf16>, vector<256x256xbf16>, vector<8x256xf32> -> vector<8x256xf32>
    %c0_12 = arith.constant 0 : index
    %c0_13 = arith.constant 0 : index
    %26 = vector.load %arg3[%c0_12, %c0_13] : memref<1x256xf32, #tpu.memory_space<vmem>>, vector<1x256xf32>
    %27 = vector.broadcast %26 : vector<1x256xf32> to vector<8x256xf32>
    %28 = arith.addf %25, %27 : vector<8x256xf32>
    %cst_14 = arith.constant 0.000000e+00 : f32
    %29 = vector.broadcast %cst_14 : f32 to vector<8x256xf32>
    %30 = arith.maximumf %28, %29 : vector<8x256xf32>
    %31 = arith.addf %0, %30 : vector<8x256xf32>
    %c0_15 = arith.constant 0 : index
    %c0_16 = arith.constant 0 : index
    %32 = vector.load %arg6[%c0_15, %c0_16] : memref<8x256xf32, #tpu.memory_space<vmem>>, vector<8x256xf32>
    tpu.vector_store %arg6[%c0_15, %c0_16], %31 {strides = array<i32>} : memref<8x256xf32, #tpu.memory_space<vmem>>, vector<8x256xf32>,
    return
  }
  func.func @transform_0(%arg0: i32) -> (i32, i32) {
    %c0_i32 = arith.constant 0 : i32
    %c0_i32_0 = arith.constant 0 : i32
    return %arg0, %c0_i32 : i32, i32
  }
  func.func @transform_1(%arg0: i32) -> (i32, i32) {
    %c0_i32 = arith.constant 0 : i32
    %c0_i32_0 = arith.constant 0 : i32
    %c0_i32_1 = arith.constant 0 : i32
    return %c0_i32, %c0_i32_0 : i32, i32
  }
  func.func @transform_2(%arg0: i32) -> (i32, i32) {
    %c0_i32 = arith.constant 0 : i32
    %c0_i32_0 = arith.constant 0 : i32
    %c0_i32_1 = arith.constant 0 : i32
    return %c0_i32, %c0_i32_0 : i32, i32
  }
  func.func @transform_3(%arg0: i32) -> (i32, i32) {
    %c0_i32 = arith.constant 0 : i32
    %c0_i32_0 = arith.constant 0 : i32
    %c0_i32_1 = arith.constant 0 : i32
    return %c0_i32, %c0_i32_0 : i32, i32
  }
  func.func @transform_4(%arg0: i32) -> (i32, i32) {
    %c0_i32 = arith.constant 0 : i32
    %c0_i32_0 = arith.constant 0 : i32
    %c0_i32_1 = arith.constant 0 : i32
    return %c0_i32, %c0_i32_0 : i32, i32
  }
  func.func @transform_5(%arg0: i32) -> (i32, i32) {
    %c0_i32 = arith.constant 0 : i32
    %c0_i32_0 = arith.constant 0 : i32
    return %arg0, %c0_i32 : i32, i32
  }
}

</mosaic_0001>

<llo_original>
// kernel: tpu_custom_call.1
$region0: #{tpu_custom_call.1}
  #allocation0 [shape = 'u32[]', space=smem, size = 0x4, offset = 0x4, fixed_abs, tag = 'smem constant byte address 0x4 - core index']
  #allocation1 [shape = 'u32[144,128]{1,0:T(1,128)}', space=vmem, size = 0x12000, scoped, tag = 'internal scratch']
  %s0 = inlined_call_operand.hbm [shape: f32[8,256], index: 0, kind: input, shape index: {}]
  %s1 = inlined_call_operand.hbm [shape: bf16[256,256], index: 1, kind: input, shape index: {}]
  %s2 = inlined_call_operand.vmem [shape: f32[1,256], index: 2, kind: input, shape index: {}]
  %s3 = inlined_call_operand.vmem [shape: f32[1,256], index: 3, kind: input, shape index: {}]
  %s4 = inlined_call_operand.vmem [shape: f32[1,256], index: 4, kind: input, shape index: {}]
  %s5 = inlined_call_operand.hbm [shape: f32[8,256], index: 5, kind: output, shape index: {}]
  %s6 = sld [smem:[#allocation0]]
  $region38: #{tpu_custom_call.1} parent=0
    _
  %s8 = ssub.s32 1, %s6
  %s9 = scalar_select 0, %s8, %s6
  $region1: #{tpu_custom_call.1} parent=0
    #allocation2 [shape = 'u8[8192]{0}', space=vmem, size = 0x2000, scoped, tag = 'input window, operand 0, single buffered']
    #allocation3 [shape = 's32[1]{0}', space=sflag, size = 0x4, scoped, tag = 'scoped memory for tpu_custom_call.1']
    #allocation4 [shape = 's32[1]{0}', space=sflag, size = 0x4, scoped, tag = 'scoped memory for tpu_custom_call.1']
    #allocation5 [shape = 'u8[131072]{0}', space=vmem, size = 0x20000, scoped, tag = 'input window, operand 1, single buffered']
    #allocation6 [shape = 's32[1]{0}', space=sflag, size = 0x4, scoped, tag = 'scoped memory for tpu_custom_call.1']
    #allocation7 [shape = 'u8[8192]{0}', space=vmem, size = 0x2000, scoped, tag = 'output window, operand 0, single buffered']
    %10 = vsyncpa [#allocation3], 0
    %11 = vsyncpa [#allocation6], 0
    %12 = vsyncpa [#allocation4], 0
    // Predicated region
    $region2: #{tpu_custom_call.1} parent=1 // pred_check
      _
    $region3: #{tpu_custom_call.1} parent=1 // pred_check_branch
      %14 = sbr.rel (0) target = $region5
    $region4: #{tpu_custom_call.1} parent=1 // pred_region
      %s16 = ssub.s32 256, 256
      %17 = vsyncadd [#allocation3], %s16
      %s19 = sshll.u32 [#allocation2], 4
      %s20 = int_to_ptr.vmem [resolvable:$true] %s19
      %22 = dma.hbm_to_vmem [thread:$0]  %s0, 256, %s20, [#allocation3]
    $region5: #{tpu_custom_call.1} parent=1 // pred_fallthru
      _
    // Predicated region
    $region6: #{tpu_custom_call.1} parent=1 // pred_check
      _
    $region7: #{tpu_custom_call.1} parent=1 // pred_check_branch
      %24 = sbr.rel (0) target = $region9
    $region8: #{tpu_custom_call.1} parent=1 // pred_region
      %s26 = ssub.s32 4096, 4096
      %27 = vsyncadd [#allocation6], %s26
      %s28 = sshll.u32 [#allocation5], 4
      %s29 = int_to_ptr.vmem [resolvable:$true] %s28
      %34 = dma.hbm_to_vmem [thread:$0]  %s1, 4096, %s29, [#allocation6], 128, 128, 8
    $region9: #{tpu_custom_call.1} parent=1 // pred_fallthru
      _
    // Predicated region
    $region10: #{tpu_custom_call.1} parent=1 // pred_check
      _
    $region11: #{tpu_custom_call.1} parent=1 // pred_check_branch
      %36 = sbr.rel (0) target = $region13
    $region12: #{tpu_custom_call.1} parent=1 // pred_region
      _
    $region13: #{tpu_custom_call.1} parent=1 // pred_fallthru
      _
    // Predicated region
    $region14: #{tpu_custom_call.1} parent=1 // pred_check
      _
    $region15: #{tpu_custom_call.1} parent=1 // pred_check_branch
      %38 = sbr.rel (0) target = $region17
    $region16: #{tpu_custom_call.1} parent=1 // pred_region
      _
    $region17: #{tpu_custom_call.1} parent=1 // pred_fallthru
      _
    // Predicated region
    $region18: #{tpu_custom_call.1} parent=1 // pred_check
      _
    $region19: #{tpu_custom_call.1} parent=1 // pred_check_branch
      %40 = sbr.rel (0) target = $region21
    $region20: #{tpu_custom_call.1} parent=1 // pred_region
      _
    $region21: #{tpu_custom_call.1} parent=1 // pred_fallthru
      _
    // Predicated region
    $region22: #{tpu_custom_call.1} parent=1 // pred_check
      _
    $region23: #{tpu_custom_call.1} parent=1 // pred_check_branch
      %42 = sbr.rel (0) target = $region25
    $region24: #{tpu_custom_call.1} parent=1 // pred_region
      %43 = dma.done [#allocation3], 256
    $region25: #{tpu_custom_call.1} parent=1 // pred_fallthru
      _
    // Predicated region
    $region26: #{tpu_custom_call.1} parent=1 // pred_check
      _
    $region27: #{tpu_custom_call.1} parent=1 // pred_check_branch
      %45 = sbr.rel (0) target = $region29
    $region28: #{tpu_custom_call.1} parent=1 // pred_region
      %46 = dma.done [#allocation6], 4096
    $region29: #{tpu_custom_call.1} parent=1 // pred_fallthru
      _
    %v47 = vld [vmem:[#allocation2] sm:$0xff]
    %v48 = vld [vmem:[#allocation2 + $0x8] sm:$0xff]
    %v49 = vadd.f32 %v47, %v48
    %50 = vadd.xlane.f32.xlu0 %v49
    %v51 = vpop.xlane.xlu0 %50
    %v52 = vrcp.pop 256.0
    %v53 = vmul.f32 %v51, %v52
    %v54 = vsub.f32 %v47, %v53
    %v55 = vsub.f32 %v48, %v53
    %v56 = vmul.f32 %v54, %v54
    %v57 = vmul.f32 %v55, %v55
    %v58 = vadd.f32 %v56, %v57
    %59 = vadd.xlane.f32.xlu0 %v58
    %v60 = vpop.xlane.xlu0 %59
    %v61 = vmul.f32 %v60, %v52
    %v62 = vadd.f32 %v61, 1e-05
    %v63 = vrsqrt.pop %v62
    %v64 = vmul.f32 %v54, %v63
    %v65 = vmul.f32 %v55, %v63
    %v66 = vld [vmem:[%s3] sm:$0x3]
    %v68 = vlaneseq
    %v69 = vshrl.u32 %v68, 7
    %v70 = vsub.s32 0, %v69
    %v71 = vrot.slane %v66, %v70
    %v72 = vlaneseq
    %v73 = vshrl.u32 %v72, 7
    %v74 = vsub.s32 1, %v73
    %v75 = vrot.slane %v66, %v74
    %v78 = vmul.f32 %v64, %v71
    %v79 = vmul.f32 %v65, %v75
    %v80 = vld [vmem:[%s4] sm:$0x3]
    %v82 = vlaneseq
    %v83 = vshrl.u32 %v82, 7
    %v84 = vsub.s32 0, %v83
    %v85 = vrot.slane %v80, %v84
    %v86 = vlaneseq
    %v87 = vshrl.u32 %v86, 7
    %v88 = vsub.s32 1, %v87
    %v89 = vrot.slane %v80, %v88
    %v92 = vadd.f32 %v78, %v85
    %v93 = vadd.f32 %v79, %v89
    %v94 = vpack.c.bf16 %v92, %v92
    %v95 = vpack.c.bf16 %v93, %v93
    %v96 = vld [vmem:[#allocation5] sm:$0xff]
    %v97 = vld [vmem:[#allocation5 + $0x8] sm:$0xff]
    %v98 = vld [vmem:[#allocation5 + $0x10] sm:$0xff]
    %v99 = vld [vmem:[#allocation5 + $0x18] sm:$0xff]
    %v100 = vld [vmem:[#allocation5 + $0x20] sm:$0xff]
    %v101 = vld [vmem:[#allocation5 + $0x28] sm:$0xff]
    %v102 = vld [vmem:[#allocation5 + $0x30] sm:$0xff]
    %v103 = vld [vmem:[#allocation5 + $0x38] sm:$0xff]
    %v104 = vld [vmem:[#allocation5 + $0x40] sm:$0xff]
    %v105 = vld [vmem:[#allocation5 + $0x48] sm:$0xff]
    %v106 = vld [vmem:[#allocation5 + $0x50] sm:$0xff]
    %v107 = vld [vmem:[#allocation5 + $0x58] sm:$0xff]
    %v108 = vld [vmem:[#allocation5 + $0x60] sm:$0xff]
    %v109 = vld [vmem:[#allocation5 + $0x68] sm:$0xff]
    %v110 = vld [vmem:[#allocation5 + $0x70] sm:$0xff]
    %v111 = vld [vmem:[#allocation5 + $0x78] sm:$0xff]
    %v112 = vld [vmem:[#allocation5 + $0x80] sm:$0xff]
    %v113 = vld [vmem:[#allocation5 + $0x88] sm:$0xff]
    %v114 = vld [vmem:[#allocation5 + $0x90] sm:$0xff]
    %v115 = vld [vmem:[#allocation5 + $0x98] sm:$0xff]
    %v116 = vld [vmem:[#allocation5 + $0xa0] sm:$0xff]
    %v117 = vld [vmem:[#allocation5 + $0xa8] sm:$0xff]
    %v118 = vld [vmem:[#allocation5 + $0xb0] sm:$0xff]
    %v119 = vld [vmem:[#allocation5 + $0xb8] sm:$0xff]
    %v120 = vld [vmem:[#allocation5 + $0xc0] sm:$0xff]
    %v121 = vld [vmem:[#allocation5 + $0xc8] sm:$0xff]
    %v122 = vld [vmem:[#allocation5 + $0xd0] sm:$0xff]
    %v123 = vld [vmem:[#allocation5 + $0xd8] sm:$0xff]
    %v124 = vld [vmem:[#allocation5 + $0xe0] sm:$0xff]
    %v125 = vld [vmem:[#allocation5 + $0xe8] sm:$0xff]
    %v126 = vld [vmem:[#allocation5 + $0xf0] sm:$0xff]
    %v127 = vld [vmem:[#allocation5 + $0xf8] sm:$0xff]
    %v128 = vld [vmem:[%s2] sm:$0x3]
    %v130 = vlaneseq
    %v131 = vshrl.u32 %v130, 7
    %v132 = vsub.s32 0, %v131
    %v133 = vrot.slane %v128, %v132
    %v134 = vlaneseq
    %v135 = vshrl.u32 %v134, 7
    %v136 = vsub.s32 1, %v135
    %v137 = vrot.slane %v128, %v136
    %v172 = vunpack.c.l.b16 %v96
    %v173 = vunpack.c.h.b16 %v96
    %v174 = vunpack.c.l.b16 %v97
    %v175 = vunpack.c.h.b16 %v97
    %v176 = vunpack.c.l.b16 %v98
    %v177 = vunpack.c.h.b16 %v98
    %v178 = vunpack.c.l.b16 %v99
    %v179 = vunpack.c.h.b16 %v99
    %v180 = vunpack.c.l.b16 %v100
    %v181 = vunpack.c.h.b16 %v100
    %v182 = vunpack.c.l.b16 %v101
    %v183 = vunpack.c.h.b16 %v101
    %v184 = vunpack.c.l.b16 %v102
    %v185 = vunpack.c.h.b16 %v102
    %v186 = vunpack.c.l.b16 %v103
    %v187 = vunpack.c.h.b16 %v103
    %v188 = vunpack.c.l.b16 %v104
    %v189 = vunpack.c.h.b16 %v104
    %v190 = vunpack.c.l.b16 %v105
    %v191 = vunpack.c.h.b16 %v105
    %v192 = vunpack.c.l.b16 %v106
    %v193 = vunpack.c.h.b16 %v106
    %v194 = vunpack.c.l.b16 %v107
    %v195 = vunpack.c.h.b16 %v107
    %v196 = vunpack.c.l.b16 %v108
    %v197 = vunpack.c.h.b16 %v108
    %v198 = vunpack.c.l.b16 %v109
    %v199 = vunpack.c.h.b16 %v109
    %v200 = vunpack.c.l.b16 %v110
    %v201 = vunpack.c.h.b16 %v110
    %v202 = vunpack.c.l.b16 %v111
    %v203 = vunpack.c.h.b16 %v111
    %v204 = vunpack.c.l.b16 %v112
    %v205 = vunpack.c.h.b16 %v112
    %v206 = vunpack.c.l.b16 %v113
    %v207 = vunpack.c.h.b16 %v113
    %v208 = vunpack.c.l.b16 %v114
    %v209 = vunpack.c.h.b16 %v114
    %v210 = vunpack.c.l.b16 %v115
    %v211 = vunpack.c.h.b16 %v115
    %v212 = vunpack.c.l.b16 %v116
    %v213 = vunpack.c.h.b16 %v116
    %v214 = vunpack.c.l.b16 %v117
    %v215 = vunpack.c.h.b16 %v117
    %v216 = vunpack.c.l.b16 %v118
    %v217 = vunpack.c.h.b16 %v118
    %v218 = vunpack.c.l.b16 %v119
    %v219 = vunpack.c.h.b16 %v119
    %v220 = vunpack.c.l.b16 %v120
    %v221 = vunpack.c.h.b16 %v120
    %v222 = vunpack.c.l.b16 %v121
    %v223 = vunpack.c.h.b16 %v121
    %v224 = vunpack.c.l.b16 %v122
    %v225 = vunpack.c.h.b16 %v122
    %v226 = vunpack.c.l.b16 %v123
    %v227 = vunpack.c.h.b16 %v123
    %v228 = vunpack.c.l.b16 %v124
    %v229 = vunpack.c.h.b16 %v124
    %v230 = vunpack.c.l.b16 %v125
    %v231 = vunpack.c.h.b16 %v125
    %v232 = vunpack.c.l.b16 %v126
    %v233 = vunpack.c.h.b16 %v126
    %v234 = vunpack.c.l.b16 %v127
    %v235 = vunpack.c.h.b16 %v127
    %v236 = vpack.c.b16 %v174, %v172
    %v237 = vpack.c.b16 %v175, %v173
    %v238 = vpack.c.b16 %v178, %v176
    %v239 = vpack.c.b16 %v179, %v177
    %v240 = vpack.c.b16 %v182, %v180
    %v241 = vpack.c.b16 %v183, %v181
    %v242 = vpack.c.b16 %v186, %v184
    %v243 = vpack.c.b16 %v187, %v185
    %v244 = vpack.c.b16 %v190, %v188
    %v245 = vpack.c.b16 %v191, %v189
    %v246 = vpack.c.b16 %v194, %v192
    %v247 = vpack.c.b16 %v195, %v193
    %v248 = vpack.c.b16 %v198, %v196
    %v249 = vpack.c.b16 %v199, %v197
    %v250 = vpack.c.b16 %v202, %v200
    %v251 = vpack.c.b16 %v203, %v201
    %v252 = vpack.c.b16 %v206, %v204
    %v253 = vpack.c.b16 %v207, %v205
    %v254 = vpack.c.b16 %v210, %v208
    %v255 = vpack.c.b16 %v211, %v209
    %v256 = vpack.c.b16 %v214, %v212
    %v257 = vpack.c.b16 %v215, %v213
    %v258 = vpack.c.b16 %v218, %v216
    %v259 = vpack.c.b16 %v219, %v217
    %v260 = vpack.c.b16 %v222, %v220
    %v261 = vpack.c.b16 %v223, %v221
    %v262 = vpack.c.b16 %v226, %v224
    %v263 = vpack.c.b16 %v227, %v225
    %v264 = vpack.c.b16 %v230, %v228
    %v265 = vpack.c.b16 %v231, %v229
    %v266 = vpack.c.b16 %v234, %v232
    %v267 = vpack.c.b16 %v235, %v233
    %300 = vmatprep.subr.bf16.mxu0 %v251
    %301 = vmatpush1.bf16.msra.mxu0 %v250
    %302 = vmatprep.subr.bf16.mxu0 %v249
    %303 = vmatpush1.bf16.msra.mxu0 %v248
    %304 = vmatprep.subr.bf16.mxu0 %v247
    %305 = vmatpush1.bf16.msra.mxu0 %v246
    %306 = vmatprep.subr.bf16.mxu0 %v245
    %307 = vmatpush1.bf16.msra.mxu0 %v244
    %308 = vmatprep.subr.bf16.mxu0 %v243
    %309 = vmatpush1.bf16.msra.mxu0 %v242
    %310 = vmatprep.subr.bf16.mxu0 %v241
    %311 = vmatpush1.bf16.msra.mxu0 %v240
    %312 = vmatprep.subr.bf16.mxu0 %v239
    %313 = vmatpush1.bf16.msra.mxu0 %v238
    %314 = vmatprep.subr.bf16.mxu0 %v237
    %315 = vmatpush1.bf16.msra.mxu0 %v236
    %316 = vmatprep.subr.bf16.mxu0 %v267
    %317 = vmatpush2.bf16.msra.mxu0 %v266
    %318 = vmatprep.subr.bf16.mxu0 %v265
    %319 = vmatpush2.bf16.msra.mxu0 %v264
    %320 = vmatprep.subr.bf16.mxu0 %v263
    %321 = vmatpush2.bf16.msra.mxu0 %v262
    %322 = vmatprep.subr.bf16.mxu0 %v261
    %323 = vmatpush2.bf16.msra.mxu0 %v260
    %324 = vmatprep.subr.bf16.mxu0 %v259
    %325 = vmatpush2.bf16.msra.mxu0 %v258
    %326 = vmatprep.subr.bf16.mxu0 %v257
    %327 = vmatpush2.bf16.msra.mxu0 %v256
    %328 = vmatprep.subr.bf16.mxu0 %v255
    %329 = vmatpush2.bf16.msra.mxu0 %v254
    %330 = vmatprep.subr.bf16.mxu0 %v253
    %331 = vmatpush2.bf16.msra.mxu0 %v252
    %332 = vmatprep.mubr.bf16.mxu0 %v95
    %333 = vmatmul.mubr.bf16.gmra.mxu0 %v94
    %v334 = vpop.f32.mrf.mxu0
    %v335 = vadd.f32 %v133, %v334
    %v336 = vpop.f32.mrf.mxu0
    %v337 = vadd.f32 %v137, %v336
    %v338 = vpop.f32.mrf.mxu0
    %v339 = vpop.f32.mrf.mxu0
    %340 = vdwg.mxu0
    %v341 = vmax.f32 %v335, 0.0
    %v342 = vmax.f32 %v337, 0.0
    %v343 = vadd.f32 %v47, %v341
    %v344 = vadd.f32 %v48, %v342
    %345 = vst [vmem:[#allocation7] sm:$0xff] %v343
    %346 = vst [vmem:[#allocation7 + $0x8] sm:$0xff] %v344
    // Predicated region
    $region30: #{tpu_custom_call.1} parent=1 // pred_check
      _
    $region31: #{tpu_custom_call.1} parent=1 // pred_check_branch
      %348 = sbr.rel (0) target = $region33
    $region32: #{tpu_custom_call.1} parent=1 // pred_region
      %s350 = ssub.s32 256, 256
      %351 = vsyncadd [#allocation4], %s350
      %s353 = sshll.u32 [#allocation7], 4
      %s354 = int_to_ptr.vmem [resolvable:$true] %s353
      %356 = dma.vmem_to_hbm [thread:$0]  %s354, 256, %s5, [#allocation4]
    $region33: #{tpu_custom_call.1} parent=1 // pred_fallthru
      _
    // Predicated region
    $region34: #{tpu_custom_call.1} parent=1 // pred_check
      _
    $region35: #{tpu_custom_call.1} parent=1 // pred_check_branch
      %358 = sbr.rel (0) target = $region37
    $region36: #{tpu_custom_call.1} parent=1 // pred_region
      %359 = dma.done [#allocation4], 256
    $region37: #{tpu_custom_call.1} parent=1 // pred_fallthru
      _
    %360 = vsyncpa [#allocation3], 1
    %361 = vsyncpa [#allocation6], 1
    %362 = vsyncpa [#allocation4], 1

</llo_original>
